<compile_context>
chip_gen: v7x
topology: tpu7x:2x2x1
jax: 0.10.0
libtpu: 0.0.40
codegen_flags: <defaults>
</compile_context>

<pallas_src>
import functools

import jax
import jax.numpy as jnp
import numpy as np
from jax.experimental import pallas as pl
from jax.experimental.pallas import tpu as pltpu

EPS = 1e-5
NEG_SLOPE = 0.01                      # PyTorch LeakyReLU default
LANES = 128                           # TPU vreg lane width
TARGET_WIDE_TILE_ROWS = 4096          # wide rows per grid step (two-pass path)
VMEM_LIMIT_BYTES = 32 * 1024 * 1024   # safe scoped limit on v5e/v6e/v7x
FUSED_VMEM_BUDGET = 12 * 1024 * 1024  # threshold for the single-pass fused path


def _round_up(a, b):
    return ((a + b - 1) // b) * b


def _cdiv(a, b):
    return -(-a // b)


def _block_diag(w, reps):
    """block_diag(w, ..., w) with `reps` copies: (k, n) -> (reps*k, reps*n)."""
    k, n = w.shape
    out = jnp.zeros((reps * k, reps * n), w.dtype)
    for r in range(reps):
        out = out.at[r * k:(r + 1) * k, r * n:(r + 1) * n].set(w)
    return out


def _full(shape):
    return pl.BlockSpec(shape, lambda i: (0, 0))


def _streamed_row_spec(tmw, fw):
    """Row-streamed x spec; 3-deep buffering if this jax supports pipeline_mode."""
    try:
        return pl.BlockSpec((tmw, fw), lambda i: (i, 0), pipeline_mode=pl.Buffered(3))
    except (TypeError, AttributeError):
        return pl.BlockSpec((tmw, fw), lambda i: (i, 0))


def _cparams(sem):
    return pltpu.CompilerParams(dimension_semantics=(sem,),
                                vmem_limit_bytes=VMEM_LIMIT_BYTES)


# --------------------------------------------------------------------------
# Kernels
# --------------------------------------------------------------------------
def _fused_kernel(x_ref, w1_ref, gamma_ref, beta_ref, w2_ref, b2_ref, o_ref,
                  *, inv_m, fold_shifts):
    """Single pass: Linear-1 -> in-kernel batch stats -> BN + LeakyReLU -> Linear-2."""
    h = jnp.dot(x_ref[...], w1_ref[...], preferred_element_type=jnp.float32)
    lane_sum = jnp.sum(h, axis=0, keepdims=True)          # (1, Dw)
    lane_sumsq = jnp.sum(h * h, axis=0, keepdims=True)    # (1, Dw)
    # Fold the `pack` lane groups so every lane holds its channel's total
    # (XLU rolls; replicated layout applies directly to h below).
    for s in fold_shifts:
        lane_sum = lane_sum + pltpu.roll(lane_sum, shift=s, axis=1)
        lane_sumsq = lane_sumsq + pltpu.roll(lane_sumsq, shift=s, axis=1)
    mean = lane_sum * inv_m
    var = lane_sumsq * inv_m - mean * mean                 # biased (training) var
    scale = gamma_ref[...] * jax.lax.rsqrt(var + EPS)
    offset = beta_ref[...] - mean * scale
    hn = h * scale + offset
    act = jnp.where(hn >= 0, hn, NEG_SLOPE * hn)
    out = jnp.dot(act, w2_ref[...], preferred_element_type=jnp.float32) + b2_ref[...]
    o_ref[...] = out.astype(o_ref.dtype)


def _stats_kernel(x_ref, w1_ref, sum_ref, sumsq_ref):
    """Pass 1: Linear-1 on a row tile; accumulate per-lane sum / sum(h^2).

    Accumulates into a resident (8, Dw) block with plain vreg adds; the 8->1
    sublane reduce happens once in the glue after the grid finishes.
    """
    @pl.when(pl.program_id(0) == 0)
    def _():
        sum_ref[...] = jnp.zeros_like(sum_ref)
        sumsq_ref[...] = jnp.zeros_like(sumsq_ref)

    h = jnp.dot(x_ref[...], w1_ref[...], preferred_element_type=jnp.float32)
    hg = h.reshape(-1, *sum_ref.shape)        # (tmw//8, 8, Dw): native tiling, free
    sum_ref[...] += jnp.sum(hg, axis=0)
    sumsq_ref[...] += jnp.sum(hg * hg, axis=0)


def _apply_kernel(x_ref, w1s_ref, offset_ref, w2_ref, b2_ref, o_ref):
    """Pass 2: Linear-1 with BN scale pre-folded into W1 -> +offset -> LeakyReLU -> Linear-2."""
    hn = jnp.dot(x_ref[...], w1s_ref[...], preferred_element_type=jnp.float32) + offset_ref[...]
    act = jnp.where(hn >= 0, hn, NEG_SLOPE * hn)
    out = jnp.dot(act, w2_ref[...], preferred_element_type=jnp.float32) + b2_ref[...]
    o_ref[...] = out.astype(o_ref.dtype)


# --------------------------------------------------------------------------
# Wrapper
# --------------------------------------------------------------------------
@jax.jit
def out_layer_pallas(x, w1, b1, gamma, beta, w2, b2):
    del b1  # a bias added before training-mode BatchNorm cancels exactly
    B, N, F = x.shape
    D = w1.shape[1]
    M = B * N

    # Largest power-of-two row packing that keeps Dw <= 128 lanes.
    pack = 1
    while 2 * pack * D <= LANES:
        pack *= 2
    Fw, Dw = F * pack, D * pack
    mw_raw = _cdiv(M, pack)

    # Choose path and tiling (all static Python).
    weight_bytes = (Fw * Dw + Dw * Dw) * 4
    fused_bytes = mw_raw * (2 * Fw + 4 * Dw) * 4 + weight_bytes
    use_fused = fused_bytes <= FUSED_VMEM_BUDGET

    if use_fused:
        nt = 1
        tmw = _round_up(max(mw_raw, 1), 8)
    else:
        nt = _cdiv(mw_raw, TARGET_WIDE_TILE_ROWS)
        tmw = _round_up(_cdiv(mw_raw, nt), 8)
    Mw = nt * tmw
    pad = Mw * pack - M

    # Zero-pad flattened rows: padded rows contribute exactly 0 to sum/sumsq
    # (no Linear-1 bias) and mean/var divide by the true M, so stats are exact.
    x_flat = x.reshape(M, F)
    if pad:
        x_flat = jnp.pad(x_flat, ((0, pad), (0, 0)))
    x_wide = x_flat.reshape(Mw, Fw)                        # free reshape (row-major)

    w1_big = _block_diag(w1, pack)                         # (Fw, Dw)
    w2_big = _block_diag(w2, pack)                         # (Dw, Dw)
    b2_wide = jnp.tile(b2.reshape(1, D), (1, pack))        # (1, Dw)

    inv_m = 1.0 / float(M)

    if use_fused:
        # ---- Single fused pass: x read once, h stays resident in VMEM ------
        gamma_wide = jnp.tile(gamma.reshape(1, D), (1, pack))
        beta_wide = jnp.tile(beta.reshape(1, D), (1, pack))
        fold_shifts = []
        s = Dw // 2
        while s >= D:
            fold_shifts.append(s)
            s //= 2
        kernel = functools.partial(_fused_kernel, inv_m=inv_m,
                                   fold_shifts=tuple(fold_shifts))
        out_wide = pl.pallas_call(
            kernel,
            out_shape=jax.ShapeDtypeStruct((Mw, Dw), x.dtype),
            grid_spec=pltpu.PrefetchScalarGridSpec(
                num_scalar_prefetch=0, grid=(1,),
                in_specs=[_full((Mw, Fw)), _full((Fw, Dw)), _full((1, Dw)),
                          _full((1, Dw)), _full((Dw, Dw)), _full((1, Dw))],
                out_specs=_full((Mw, Dw))),
            compiler_params=_cparams("arbitrary"),
        )(x_wide, w1_big, gamma_wide, beta_wide, w2_big, b2_wide)
    else:
        # ---- Pass 1: global per-channel batch statistics of h = x @ W1 -----
        row_spec = _streamed_row_spec(tmw, Fw)
        lane_sum, lane_sumsq = pl.pallas_call(
            _stats_kernel,
            out_shape=(jax.ShapeDtypeStruct((8, Dw), jnp.float32),
                       jax.ShapeDtypeStruct((8, Dw), jnp.float32)),
            grid_spec=pltpu.PrefetchScalarGridSpec(
                num_scalar_prefetch=0, grid=(nt,),
                in_specs=[row_spec, _full((Fw, Dw))],
                out_specs=[_full((8, Dw)), _full((8, Dw))]),
            compiler_params=_cparams("arbitrary"),
        )(x_wide, w1_big)

        # Tiny XLA glue: fold sublanes + lane groups, pre-fold BN into
        # (a) a column scaling of W1 and (b) a per-lane offset.
        ch_sum = lane_sum.sum(axis=0).reshape(pack, D).sum(axis=0)
        ch_sumsq = lane_sumsq.sum(axis=0).reshape(pack, D).sum(axis=0)
        mean = ch_sum * inv_m
        var = ch_sumsq * inv_m - mean * mean               # biased (training) var
        scale = gamma.reshape(D) * jax.lax.rsqrt(var + EPS)
        offset = beta.reshape(D) - mean * scale
        scale_wide = jnp.tile(scale, pack).reshape(1, Dw)
        offset_wide = jnp.tile(offset, pack).reshape(1, Dw)
        w1_scaled = w1_big * scale_wide                    # BN scale folded into W1

        # ---- Pass 2: (x @ W1*scale) + offset -> LeakyReLU -> Linear-2 ------
        out_wide = pl.pallas_call(
            _apply_kernel,
            out_shape=jax.ShapeDtypeStruct((Mw, Dw), x.dtype),
            grid_spec=pltpu.PrefetchScalarGridSpec(
                num_scalar_prefetch=0, grid=(nt,),
                in_specs=[row_spec, _full((Fw, Dw)), _full((1, Dw)),
                          _full((Dw, Dw)), _full((1, Dw))],
                out_specs=pl.BlockSpec((tmw, Dw), lambda i: (i, 0))),
            compiler_params=_cparams("parallel"),
        )(x_wide, w1_scaled, offset_wide, w2_big, b2_wide)

    # (Mw, Dw) row-major == (Mw*pack, D) row-major; drop the padded rows.
    out_rows = out_wide.reshape(Mw * pack, D)[:M]
    return out_rows.reshape(B, N, D)


# --------------------------------------------------------------------------
# Pure-JAX reference
# --------------------------------------------------------------------------
def out_layer_ref(x, w1, b1, gamma, beta, w2, b2):
    B, N, F = x.shape
    h = x.reshape(B * N, F) @ w1 + b1
    mean = jnp.mean(h, axis=0, keepdims=True)
    var = jnp.mean((h - mean) ** 2, axis=0, keepdims=True)
    hn = (h - mean) / jnp.sqrt(var + EPS) * gamma + beta
    act = jnp.where(hn >= 0, hn, NEG_SLOPE * hn)
    out = act @ w2 + b2
    return out.reshape(B, N, -1)


def _make_params(key, in_num, dim, inter_num):
    k1, k2, k3, k4 = jax.random.split(key, 4)
    bnd1 = 1.0 / np.sqrt(in_num)
    w1 = jax.random.uniform(k1, (in_num, dim), minval=-bnd1, maxval=bnd1, dtype=jnp.float32)
    b1 = jax.random.uniform(k2, (1, dim), minval=-bnd1, maxval=bnd1, dtype=jnp.float32)
    bnd2 = 1.0 / np.sqrt(inter_num)
    w2 = jax.random.uniform(k3, (inter_num, dim), minval=-bnd2, maxval=bnd2, dtype=jnp.float32)
    b2 = jax.random.uniform(k4, (1, dim), minval=-bnd2, maxval=bnd2, dtype=jnp.float32)
    gamma = jnp.ones((1, dim), dtype=jnp.float32)   # BatchNorm1d init: weight=1
    beta = jnp.zeros((1, dim), dtype=jnp.float32)   # BatchNorm1d init: bias=0
    return w1, b1, gamma, beta, w2, b2


if __name__ == "__main__":
    in_num = 16
    dim = inter_num = 32  # dim == inter_num keeps the original module consistent

    key = jax.random.PRNGKey(0)
    kx1, kx2, kp = jax.random.split(key, 3)
    w1, b1, gamma, beta, w2, b2 = _make_params(kp, in_num, dim, inter_num)

    # --- Small config: exercises the fused single-pass path ----------------
    batch, node_num = 2, 8
    x_small = jax.random.normal(kx1, (batch, node_num, in_num), dtype=jnp.float32)
    out = jax.block_until_ready(out_layer_pallas(x_small, w1, b1, gamma, beta, w2, b2))
    ref = out_layer_ref(x_small, w1, b1, gamma, beta, w2, b2)
    np.testing.assert_allclose(np.asarray(out), np.asarray(ref), rtol=1e-4, atol=1e-5)

    # --- Larger config: exercises the two-pass tiled path + row padding ----
    batch2, node_num2 = 3, 9001   # B*N = 27003 (not a multiple of 4 -> padding)
    x_big = jax.random.normal(kx2, (batch2, node_num2, in_num), dtype=jnp.float32)
    out_big = jax.block_until_ready(out_layer_pallas(x_big, w1, b1, gamma, beta, w2, b2))
    ref_big = out_layer_ref(x_big, w1, b1, gamma, beta, w2, b2)
    np.testing.assert_allclose(np.asarray(out_big), np.asarray(ref_big), rtol=1e-2, atol=1e-3)

    print("KERNEL_OK")
</pallas_src>

<mosaic_0001>
module attributes {stable_mosaic.version = 11 : i64} {
  func.func @_fused_kernel(%arg0: i32, %arg1: memref<8x64xf32, #tpu.memory_space<vmem>>, %arg2: memref<64x128xf32, #tpu.memory_space<vmem>>, %arg3: memref<1x128xf32, #tpu.memory_space<vmem>>, %arg4: memref<1x128xf32, #tpu.memory_space<vmem>>, %arg5: memref<128x128xf32, #tpu.memory_space<vmem>>, %arg6: memref<1x128xf32, #tpu.memory_space<vmem>>, %arg7: memref<8x128xf32, #tpu.memory_space<vmem>>) attributes {dimension_semantics = [#tpu.dimension_semantics<arbitrary>], iteration_bounds = array<i64: 1>, scalar_prefetch = 0 : i64, scratch_operands = 0 : i64, tpu.core_type = #tpu.core_type<tc>, window_params = [{pipeline_mode = #tpu.pipeline_mode<synchronous>, transform_indices = @transform_0, window_bounds = array<i64: 8, 64>}, {pipeline_mode = #tpu.pipeline_mode<synchronous>, transform_indices = @transform_1, window_bounds = array<i64: 64, 128>}, {pipeline_mode = #tpu.pipeline_mode<synchronous>, transform_indices = @transform_2, window_bounds = array<i64: 1, 128>}, {pipeline_mode = #tpu.pipeline_mode<synchronous>, transform_indices = @transform_3, window_bounds = array<i64: 1, 128>}, {pipeline_mode = #tpu.pipeline_mode<synchronous>, transform_indices = @transform_4, window_bounds = array<i64: 128, 128>}, {pipeline_mode = #tpu.pipeline_mode<synchronous>, transform_indices = @transform_5, window_bounds = array<i64: 1, 128>}, {pipeline_mode = #tpu.pipeline_mode<synchronous>, transform_indices = @transform_6, window_bounds = array<i64: 8, 128>}]} {
    %c0 = arith.constant 0 : index
    %c0_0 = arith.constant 0 : index
    %0 = vector.load %arg1[%c0, %c0_0] : memref<8x64xf32, #tpu.memory_space<vmem>>, vector<8x64xf32>
    %c0_1 = arith.constant 0 : index
    %c0_2 = arith.constant 0 : index
    %1 = vector.load %arg2[%c0_1, %c0_2] : memref<64x128xf32, #tpu.memory_space<vmem>>, vector<64x128xf32>
    %cst = arith.constant dense<0.000000e+00> : vector<8x128xf32>
    %2 = tpu.matmul %0, %1, %cst {dimension_numbers = #tpu.dot_dimension_numbers<[1], [0], [0], [1], [0, 0, 1, 1], [], []>} : vector<8x64xf32>, vector<64x128xf32>, vector<8x128xf32> -> vector<8x128xf32>
    %cst_3 = arith.constant dense<0.000000e+00> : vector<128xf32>
    %3 = vector.multi_reduction <add>, %2, %cst_3 [0] : vector<8x128xf32> to vector<128xf32>
    %4 = vector.shape_cast %3 : vector<128xf32> to vector<1x128xf32>
    %5 = arith.mulf %2, %2 : vector<8x128xf32>
    %cst_4 = arith.constant dense<0.000000e+00> : vector<128xf32>
    %6 = vector.multi_reduction <add>, %5, %cst_4 [0] : vector<8x128xf32> to vector<128xf32>
    %7 = vector.shape_cast %6 : vector<128xf32> to vector<1x128xf32>
    %c64_i32 = arith.constant 64 : i32
    %8 = tpu.dynamic_rotate %4 by %c64_i32 dim 1 : vector<1x128xf32>, i32 -> vector<1x128xf32>
    %9 = arith.addf %4, %8 : vector<1x128xf32>
    %c64_i32_5 = arith.constant 64 : i32
    %10 = tpu.dynamic_rotate %7 by %c64_i32_5 dim 1 : vector<1x128xf32>, i32 -> vector<1x128xf32>
    %11 = arith.addf %7, %10 : vector<1x128xf32>
    %c32_i32 = arith.constant 32 : i32
    %12 = tpu.dynamic_rotate %9 by %c32_i32 dim 1 : vector<1x128xf32>, i32 -> vector<1x128xf32>
    %13 = arith.addf %9, %12 : vector<1x128xf32>
    %c32_i32_6 = arith.constant 32 : i32
    %14 = tpu.dynamic_rotate %11 by %c32_i32_6 dim 1 : vector<1x128xf32>, i32 -> vector<1x128xf32>
    %15 = arith.addf %11, %14 : vector<1x128xf32>
    %cst_7 = arith.constant 6.250000e-02 : f32
    %16 = vector.broadcast %cst_7 : f32 to vector<1x128xf32>
    %17 = arith.mulf %13, %16 : vector<1x128xf32>
    %cst_8 = arith.constant 6.250000e-02 : f32
    %18 = vector.broadcast %cst_8 : f32 to vector<1x128xf32>
    %19 = arith.mulf %15, %18 : vector<1x128xf32>
    %20 = arith.mulf %17, %17 : vector<1x128xf32>
    %21 = arith.subf %19, %20 : vector<1x128xf32>
    %c0_9 = arith.constant 0 : index
    %c0_10 = arith.constant 0 : index
    %22 = vector.load %arg3[%c0_9, %c0_10] : memref<1x128xf32, #tpu.memory_space<vmem>>, vector<1x128xf32>
    %cst_11 = arith.constant 9.99999974E-6 : f32
    %23 = vector.broadcast %cst_11 : f32 to vector<1x128xf32>
    %24 = arith.addf %21, %23 : vector<1x128xf32>
    %25 = math.rsqrt %24 : vector<1x128xf32>
    %26 = arith.mulf %22, %25 : vector<1x128xf32>
    %c0_12 = arith.constant 0 : index
    %c0_13 = arith.constant 0 : index
    %27 = vector.load %arg4[%c0_12, %c0_13] : memref<1x128xf32, #tpu.memory_space<vmem>>, vector<1x128xf32>
    %28 = arith.mulf %17, %26 : vector<1x128xf32>
    %29 = arith.subf %27, %28 : vector<1x128xf32>
    %30 = vector.broadcast %26 : vector<1x128xf32> to vector<8x128xf32>
    %31 = arith.mulf %2, %30 : vector<8x128xf32>
    %32 = vector.broadcast %29 : vector<1x128xf32> to vector<8x128xf32>
    %33 = arith.addf %31, %32 : vector<8x128xf32>
    %cst_14 = arith.constant 0.000000e+00 : f32
    %34 = vector.broadcast %cst_14 : f32 to vector<8x128xf32>
    %35 = arith.cmpf oge, %33, %34 : vector<8x128xf32>
    %cst_15 = arith.constant 0.00999999977 : f32
    %36 = vector.broadcast %cst_15 : f32 to vector<8x128xf32>
    %37 = arith.mulf %36, %33 : vector<8x128xf32>
    %38 = arith.select %35, %33, %37 : vector<8x128xi1>, vector<8x128xf32>
    %c0_16 = arith.constant 0 : index
    %c0_17 = arith.constant 0 : index
    %39 = vector.load %arg5[%c0_16, %c0_17] : memref<128x128xf32, #tpu.memory_space<vmem>>, vector<128x128xf32>
    %cst_18 = arith.constant dense<0.000000e+00> : vector<8x128xf32>
    %40 = tpu.matmul %38, %39, %cst_18 {dimension_numbers = #tpu.dot_dimension_numbers<[1], [0], [0], [1], [0, 0, 1, 1], [], []>} : vector<8x128xf32>, vector<128x128xf32>, vector<8x128xf32> -> vector<8x128xf32>
    %c0_19 = arith.constant 0 : index
    %c0_20 = arith.constant 0 : index
    %41 = vector.load %arg6[%c0_19, %c0_20] : memref<1x128xf32, #tpu.memory_space<vmem>>, vector<1x128xf32>
    %42 = vector.broadcast %41 : vector<1x128xf32> to vector<8x128xf32>
    %43 = arith.addf %40, %42 : vector<8x128xf32>
    %c0_21 = arith.constant 0 : index
    %c0_22 = arith.constant 0 : index
    %44 = vector.load %arg7[%c0_21, %c0_22] : memref<8x128xf32, #tpu.memory_space<vmem>>, vector<8x128xf32>
    tpu.vector_store %arg7[%c0_21, %c0_22], %43 {strides = array<i32>} : memref<8x128xf32, #tpu.memory_space<vmem>>, vector<8x128xf32>,
    return
  }
  func.func @transform_0(%arg0: i32) -> (i32, i32) {
    %c0_i32 = arith.constant 0 : i32
    %c0_i32_0 = arith.constant 0 : i32
    %c0_i32_1 = arith.constant 0 : i32
    return %c0_i32, %c0_i32_0 : i32, i32
  }
  func.func @transform_1(%arg0: i32) -> (i32, i32) {
    %c0_i32 = arith.constant 0 : i32
    %c0_i32_0 = arith.constant 0 : i32
    %c0_i32_1 = arith.constant 0 : i32
    return %c0_i32, %c0_i32_0 : i32, i32
  }
  func.func @transform_2(%arg0: i32) -> (i32, i32) {
    %c0_i32 = arith.constant 0 : i32
    %c0_i32_0 = arith.constant 0 : i32
    %c0_i32_1 = arith.constant 0 : i32
    return %c0_i32, %c0_i32_0 : i32, i32
  }
  func.func @transform_3(%arg0: i32) -> (i32, i32) {
    %c0_i32 = arith.constant 0 : i32
    %c0_i32_0 = arith.constant 0 : i32
    %c0_i32_1 = arith.constant 0 : i32
    return %c0_i32, %c0_i32_0 : i32, i32
  }
  func.func @transform_4(%arg0: i32) -> (i32, i32) {
    %c0_i32 = arith.constant 0 : i32
    %c0_i32_0 = arith.constant 0 : i32
    %c0_i32_1 = arith.constant 0 : i32
    return %c0_i32, %c0_i32_0 : i32, i32
  }
  func.func @transform_5(%arg0: i32) -> (i32, i32) {
    %c0_i32 = arith.constant 0 : i32
    %c0_i32_0 = arith.constant 0 : i32
    %c0_i32_1 = arith.constant 0 : i32
    return %c0_i32, %c0_i32_0 : i32, i32
  }
  func.func @transform_6(%arg0: i32) -> (i32, i32) {
    %c0_i32 = arith.constant 0 : i32
    %c0_i32_0 = arith.constant 0 : i32
    %c0_i32_1 = arith.constant 0 : i32
    return %c0_i32, %c0_i32_0 : i32, i32
  }
}

</mosaic_0001>

<llo_original>
// kernel: out_layer_pallas.1
$region0: #{out_layer_pallas.1}
  #allocation0 [shape = 'u32[]', space=smem, size = 0x4, offset = 0x4, fixed_abs, tag = 'smem constant byte address 0x4 - core index']
  #allocation1 [shape = 'u32[144,128]{1,0:T(1,128)}', space=vmem, size = 0x12000, scoped, tag = 'internal scratch']
  %s0 = inlined_call_operand.vmem [shape: f32[8,64], index: 0, kind: input, shape index: {}]
  %s1 = inlined_call_operand.vmem [shape: f32[64,128], index: 1, kind: input, shape index: {}]
  %s2 = inlined_call_operand.vmem [shape: f32[1,128], index: 2, kind: input, shape index: {}]
  %s3 = inlined_call_operand.vmem [shape: f32[1,128], index: 3, kind: input, shape index: {}]
  %s4 = inlined_call_operand.vmem [shape: f32[128,128], index: 4, kind: input, shape index: {}]
  %s5 = inlined_call_operand.vmem [shape: f32[1,128], index: 5, kind: input, shape index: {}]
  %s6 = inlined_call_operand.vmem [shape: f32[8,128], index: 6, kind: output, shape index: {}]
  %s7 = sld [smem:[#allocation0]]
  $region34: #{out_layer_pallas.1} parent=0
    _
  %s9 = ssub.s32 1, %s7
  %s10 = scalar_select 0, %s9, %s7
  // Predicated region
  $region2: #{out_layer_pallas.1} parent=0 // pred_check
    _
  $region3: #{out_layer_pallas.1} parent=0 // pred_check_branch
    %12 = sbr.rel (0) target = $region5
  $region4: #{out_layer_pallas.1} parent=0 // pred_region
    _
  $region5: #{out_layer_pallas.1} parent=0 // pred_fallthru
    _
  // Predicated region
  $region6: #{out_layer_pallas.1} parent=0 // pred_check
    _
  $region7: #{out_layer_pallas.1} parent=0 // pred_check_branch
    %14 = sbr.rel (0) target = $region9
  $region8: #{out_layer_pallas.1} parent=0 // pred_region
    _
  $region9: #{out_layer_pallas.1} parent=0 // pred_fallthru
    _
  // Predicated region
  $region10: #{out_layer_pallas.1} parent=0 // pred_check
    _
  $region11: #{out_layer_pallas.1} parent=0 // pred_check_branch
    %16 = sbr.rel (0) target = $region13
  $region12: #{out_layer_pallas.1} parent=0 // pred_region
    _
  $region13: #{out_layer_pallas.1} parent=0 // pred_fallthru
    _
  // Predicated region
  $region14: #{out_layer_pallas.1} parent=0 // pred_check
    _
  $region15: #{out_layer_pallas.1} parent=0 // pred_check_branch
    %18 = sbr.rel (0) target = $region17
  $region16: #{out_layer_pallas.1} parent=0 // pred_region
    _
  $region17: #{out_layer_pallas.1} parent=0 // pred_fallthru
    _
  // Predicated region
  $region18: #{out_layer_pallas.1} parent=0 // pred_check
    _
  $region19: #{out_layer_pallas.1} parent=0 // pred_check_branch
    %20 = sbr.rel (0) target = $region21
  $region20: #{out_layer_pallas.1} parent=0 // pred_region
    _
  $region21: #{out_layer_pallas.1} parent=0 // pred_fallthru
    _
  // Predicated region
  $region22: #{out_layer_pallas.1} parent=0 // pred_check
    _
  $region23: #{out_layer_pallas.1} parent=0 // pred_check_branch
    %22 = sbr.rel (0) target = $region25
  $region24: #{out_layer_pallas.1} parent=0 // pred_region
    _
  $region25: #{out_layer_pallas.1} parent=0 // pred_fallthru
    _
  %v23 = vld [vmem:[%s0] sm:$0xff]
  %v24 = vld [vmem:[%s1] sm:$0xff]
  %v25 = vld [vmem:[%s1 + $0x8] sm:$0xff]
  %v26 = vld [vmem:[%s1 + $0x10] sm:$0xff]
  %v27 = vld [vmem:[%s1 + $0x18] sm:$0xff]
  %v28 = vld [vmem:[%s1 + $0x20] sm:$0xff]
  %v29 = vld [vmem:[%s1 + $0x28] sm:$0xff]
  %v30 = vld [vmem:[%s1 + $0x30] sm:$0xff]
  %v31 = vld [vmem:[%s1 + $0x38] sm:$0xff]
  %vm32 = vcmask 523264
  %v34 = vsel %vm32, %v23, 0
  %36 = vmatprep.subr.mxu0 0.0
  %37 = vmatpush1.msra.mxu0 %v24
  %38 = vmatprep.subr.mxu0 0.0
  %39 = vmatpush1.msra.mxu0 %v25
  %40 = vmatprep.subr.mxu0 0.0
  %41 = vmatpush1.msra.mxu0 %v26
  %42 = vmatprep.subr.mxu0 0.0
  %43 = vmatpush1.msra.mxu0 %v27
  %44 = vmatprep.subr.mxu0 0.0
  %45 = vmatpush1.msra.mxu0 %v28
  %46 = vmatprep.subr.mxu0 0.0
  %47 = vmatpush1.msra.mxu0 %v29
  %48 = vmatprep.subr.mxu0 0.0
  %49 = vmatpush1.msra.mxu0 %v30
  %50 = vmatprep.subr.mxu0 0.0
  %51 = vmatpush1.msra.mxu0 %v31
  %52 = vmatprep.subr.mxu0 0.0
  %53 = vmatpush1.msra.mxu0 0.0
  %54 = vmatprep.subr.mxu0 0.0
  %55 = vmatpush1.msra.mxu0 0.0
  %56 = vmatprep.subr.mxu0 0.0
  %57 = vmatpush1.msra.mxu0 0.0
  %58 = vmatprep.subr.mxu0 0.0
  %59 = vmatpush1.msra.mxu0 0.0
  %60 = vmatprep.subr.mxu0 0.0
  %61 = vmatpush1.msra.mxu0 0.0
  %62 = vmatprep.subr.mxu0 0.0
  %63 = vmatpush1.msra.mxu0 0.0
  %64 = vmatprep.subr.mxu0 0.0
  %65 = vmatpush1.msra.mxu0 0.0
  %66 = vmatprep.subr.mxu0 0.0
  %67 = vmatpush1.msra.mxu0 0.0
  %68 = vmatprep.subr.mxu0 0.0
  %69 = vmatpush1.msra.mxu0 0.0
  %70 = vmatprep.subr.mxu0 0.0
  %71 = vmatpush1.msra.mxu0 0.0
  %72 = vmatprep.subr.mxu0 0.0
  %73 = vmatpush1.msra.mxu0 0.0
  %74 = vmatprep.subr.mxu0 0.0
  %75 = vmatpush1.msra.mxu0 0.0
  %76 = vmatprep.subr.mxu0 0.0
  %77 = vmatpush1.msra.mxu0 0.0
  %78 = vmatprep.subr.mxu0 0.0
  %79 = vmatpush1.msra.mxu0 0.0
  %80 = vmatprep.subr.mxu0 0.0
  %81 = vmatpush1.msra.mxu0 0.0
  %82 = vmatprep.subr.mxu0 0.0
  %83 = vmatpush1.msra.mxu0 0.0
  %84 = vmatprep.subr.mxu0 0.0
  %85 = vmatpush1.msra.mxu0 0.0
  %86 = vmatprep.subr.mxu0 0.0
  %87 = vmatpush1.msra.mxu0 0.0
  %88 = vmatprep.subr.mxu0 0.0
  %89 = vmatpush1.msra.mxu0 0.0
  %90 = vmatprep.subr.mxu0 0.0
  %91 = vmatpush1.msra.mxu0 0.0
  %92 = vmatprep.subr.mxu0 0.0
  %93 = vmatpush1.msra.mxu0 0.0
  %94 = vmatprep.subr.mxu0 0.0
  %95 = vmatpush1.msra.mxu0 0.0
  %96 = vmatprep.subr.mxu0 0.0
  %97 = vmatpush1.msra.mxu0 0.0
  %98 = vmatprep.subr.mxu0 0.0
  %99 = vmatpush1.msra.mxu0 0.0
  %100 = vmatprep.mubr.f32.mxu0 0.0
  %101 = vmatmul.mubr.f32.gmra.mrb[0].mxu0 %v34
  %v102 = vpop.f32.mrb[0].mxu0
  %v103 = vadd.f32 0.0, %v102
  %v104 = vpop.f32.mrb[0].mxu0
  %105 = vdwg.mxu0
  %v106 = vrot.slane %v103, 4
  %v107 = vadd.f32 %v103, %v106
  %v108 = vrot.slane %v107, 2
  %v109 = vadd.f32 %v107, %v108
  %v110 = vrot.slane %v109, 1
  %v111 = vadd.f32 %v109, %v110
  %v112 = vmul.f32 %v103, %v103
  %v113 = vrot.slane %v112, 4
  %v114 = vadd.f32 %v112, %v113
  %v115 = vrot.slane %v114, 2
  %v116 = vadd.f32 %v114, %v115
  %v117 = vrot.slane %v116, 1
  %v118 = vadd.f32 %v116, %v117
  %119 = vrot.lane.b32.xlu0 %v111, 64
  %v120 = vpop.permute.xlu0 %119
  %v121 = vadd.f32 %v111, %v120
  %122 = vrot.lane.b32.xlu0 %v118, 64
  %v123 = vpop.permute.xlu0 %122
  %v124 = vadd.f32 %v118, %v123
  %125 = vrot.lane.b32.xlu0 %v121, 32
  %v126 = vpop.permute.xlu0 %125
  %v127 = vadd.f32 %v121, %v126
  %128 = vrot.lane.b32.xlu0 %v124, 32
  %v129 = vpop.permute.xlu0 %128
  %v130 = vadd.f32 %v124, %v129
  %v131 = vmul.f32 %v127, 0.0625
  %v132 = vmul.f32 %v130, 0.0625
  %v133 = vmul.f32 %v131, %v131
  %v134 = vsub.f32 %v132, %v133
  %v135 = vld [vmem:[%s2] sm:$0x1]
  %v136 = vadd.f32 %v134, 1e-05
  %v137 = vrsqrt.pop %v136
  %v138 = vmul.f32 %v135, %v137
  %v139 = vld [vmem:[%s3] sm:$0x1]
  %v140 = vmul.f32 %v131, %v138
  %v141 = vsub.f32 %v139, %v140
  %v143 = vlaneseq
  %v144 = vshrl.u32 %v143, 7
  %v145 = vsub.s32 0, %v144
  %v146 = vrot.slane %v138, %v145
  %v148 = vmul.f32 %v103, %v146
  %v150 = vlaneseq
  %v151 = vshrl.u32 %v150, 7
  %v152 = vsub.s32 0, %v151
  %v153 = vrot.slane %v141, %v152
  %v155 = vadd.f32 %v148, %v153
  %vm156 = vcmp.ge.f32.partialorder %v155, 0.0
  %v157 = vmul.f32 %v155, 0.01
  %v158 = vsel %vm156, %v155, %v157
  %v159 = vld [vmem:[%s4] sm:$0xff]
  %v160 = vld [vmem:[%s4 + $0x8] sm:$0xff]
  %v161 = vld [vmem:[%s4 + $0x10] sm:$0xff]
  %v162 = vld [vmem:[%s4 + $0x18] sm:$0xff]
  %v163 = vld [vmem:[%s4 + $0x20] sm:$0xff]
  %v164 = vld [vmem:[%s4 + $0x28] sm:$0xff]
  %v165 = vld [vmem:[%s4 + $0x30] sm:$0xff]
  %v166 = vld [vmem:[%s4 + $0x38] sm:$0xff]
  %v167 = vld [vmem:[%s4 + $0x40] sm:$0xff]
  %v168 = vld [vmem:[%s4 + $0x48] sm:$0xff]
  %v169 = vld [vmem:[%s4 + $0x50] sm:$0xff]
  %v170 = vld [vmem:[%s4 + $0x58] sm:$0xff]
  %v171 = vld [vmem:[%s4 + $0x60] sm:$0xff]
  %v172 = vld [vmem:[%s4 + $0x68] sm:$0xff]
  %v173 = vld [vmem:[%s4 + $0x70] sm:$0xff]
  %v174 = vld [vmem:[%s4 + $0x78] sm:$0xff]
  %v175 = vld [vmem:[%s5] sm:$0x1]
  %v177 = vlaneseq
  %v178 = vshrl.u32 %v177, 7
  %v179 = vsub.s32 0, %v178
  %v180 = vrot.slane %v175, %v179
  %182 = vmatprep.subr.mxu0 0.0
  %183 = vmatpush1.msra.mxu0 %v159
  %184 = vmatprep.subr.mxu0 0.0
  %185 = vmatpush1.msra.mxu0 %v160
  %186 = vmatprep.subr.mxu0 0.0
  %187 = vmatpush1.msra.mxu0 %v161
  %188 = vmatprep.subr.mxu0 0.0
  %189 = vmatpush1.msra.mxu0 %v162
  %190 = vmatprep.subr.mxu0 0.0
  %191 = vmatpush1.msra.mxu0 %v163
  %192 = vmatprep.subr.mxu0 0.0
  %193 = vmatpush1.msra.mxu0 %v164
  %194 = vmatprep.subr.mxu0 0.0
  %195 = vmatpush1.msra.mxu0 %v165
  %196 = vmatprep.subr.mxu0 0.0
  %197 = vmatpush1.msra.mxu0 %v166
  %198 = vmatprep.subr.mxu0 0.0
  %199 = vmatpush1.msra.mxu0 %v167
  %200 = vmatprep.subr.mxu0 0.0
  %201 = vmatpush1.msra.mxu0 %v168
  %202 = vmatprep.subr.mxu0 0.0
  %203 = vmatpush1.msra.mxu0 %v169
  %204 = vmatprep.subr.mxu0 0.0
  %205 = vmatpush1.msra.mxu0 %v170
  %206 = vmatprep.subr.mxu0 0.0
  %207 = vmatpush1.msra.mxu0 %v171
  %208 = vmatprep.subr.mxu0 0.0
  %209 = vmatpush1.msra.mxu0 %v172
  %210 = vmatprep.subr.mxu0 0.0
  %211 = vmatpush1.msra.mxu0 %v173
  %212 = vmatprep.subr.mxu0 0.0
  %213 = vmatpush1.msra.mxu0 %v174
  %214 = vmatprep.subr.mxu0 0.0
  %215 = vmatpush1.msra.mxu0 0.0
  %216 = vmatprep.subr.mxu0 0.0
  %217 = vmatpush1.msra.mxu0 0.0
  %218 = vmatprep.subr.mxu0 0.0
  %219 = vmatpush1.msra.mxu0 0.0
  %220 = vmatprep.subr.mxu0 0.0
  %221 = vmatpush1.msra.mxu0 0.0
  %222 = vmatprep.subr.mxu0 0.0
  %223 = vmatpush1.msra.mxu0 0.0
  %224 = vmatprep.subr.mxu0 0.0
  %225 = vmatpush1.msra.mxu0 0.0
  %226 = vmatprep.subr.mxu0 0.0
  %227 = vmatpush1.msra.mxu0 0.0
  %228 = vmatprep.subr.mxu0 0.0
  %229 = vmatpush1.msra.mxu0 0.0
  %230 = vmatprep.subr.mxu0 0.0
  %231 = vmatpush1.msra.mxu0 0.0
  %232 = vmatprep.subr.mxu0 0.0
  %233 = vmatpush1.msra.mxu0 0.0
  %234 = vmatprep.subr.mxu0 0.0
  %235 = vmatpush1.msra.mxu0 0.0
  %236 = vmatprep.subr.mxu0 0.0
  %237 = vmatpush1.msra.mxu0 0.0
  %238 = vmatprep.subr.mxu0 0.0
  %239 = vmatpush1.msra.mxu0 0.0
  %240 = vmatprep.subr.mxu0 0.0
  %241 = vmatpush1.msra.mxu0 0.0
  %242 = vmatprep.subr.mxu0 0.0
  %243 = vmatpush1.msra.mxu0 0.0
  %244 = vmatprep.subr.mxu0 0.0
  %245 = vmatpush1.msra.mxu0 0.0
  %246 = vmatprep.mubr.f32.mxu0 0.0
  %247 = vmatmul.mubr.f32.gmra.mrb[0].mxu0 %v158
  %v248 = vpop.f32.mrb[0].mxu0
  %v249 = vadd.f32 %v180, %v248
  %v250 = vpop.f32.mrb[0].mxu0
  %251 = vdwg.mxu0
  %252 = vst [vmem:[%s6] sm:$0xff] %v249
  // Predicated region
  $region26: #{out_layer_pallas.1} parent=0 // pred_check
    _
  $region27: #{out_layer_pallas.1} parent=0 // pred_check_branch
    %254 = sbr.rel (0) target = $region29
  $region28: #{out_layer_pallas.1} parent=0 // pred_region
    _
  $region29: #{out_layer_pallas.1} parent=0 // pred_fallthru
    _
  // Predicated region
  $region30: #{out_layer_pallas.1} parent=0 // pred_check
    _
  $region31: #{out_layer_pallas.1} parent=0 // pred_check_branch
    %256 = sbr.rel (0) target = $region33
  $region32: #{out_layer_pallas.1} parent=0 // pred_region
    _
  $region33: #{out_layer_pallas.1} parent=0 // pred_fallthru
    _

</llo_original>
